<compile_context>
chip_gen: v7x
topology: tpu7x:2x2x1
jax: 0.10.0
libtpu: 0.0.40
codegen_flags: <defaults>
</compile_context>

<pallas_src>
import functools
import math

import jax
import jax.numpy as jnp
from jax import lax
from jax.experimental import pallas as pl
from jax.experimental.pallas import tpu as pltpu


def _round_up(x, n):
    return ((x + n - 1) // n) * n


def _tpu_generation():
    """Best-effort TPU generation detection for tile / VMEM defaults."""
    try:
        kind = jax.devices()[0].device_kind.lower()
    except Exception:  # defensive: fall back to conservative defaults
        return "other"
    if "v5 lite" in kind or "v5lite" in kind or "v5e" in kind:
        return "v5e"
    if "v6" in kind:
        return "v6e"
    if "v7" in kind:
        return "v7x"
    return "other"


def adaface_loss_kernel(emb_ref, w_ref, labels_ref, out_ref,
                        m_scr, l_scr, t_scr,
                        *, m, h, s, class_tile, num_padded):
    """One (batch_tile, class_tile) step of the streamed AdaFace CE loss.

    emb_ref:    (TB, E)  pre-normalized embeddings, already in the MXU dtype.
    w_ref:      (TC, E)  pre-normalized weight tile, already in the MXU dtype.
    labels_ref: (TB, 1)  int32.
    out_ref:    (TB, 1)  f32 per-example loss (written on the last class tile).
    """
    ci = pl.program_id(1)

    # ---- init running log-sum-exp state on the first class tile -------------
    @pl.when(ci == 0)
    def _init():
        m_scr[...] = jnp.full(m_scr.shape, -1e30, dtype=jnp.float32)
        l_scr[...] = jnp.zeros(l_scr.shape, dtype=jnp.float32)
        t_scr[...] = jnp.zeros(t_scr.shape, dtype=jnp.float32)

    # ---- cosine logits on the MXU: (TB,E) x (TC,E) contracting E ------------
    # No transposed weight tile is materialized; accumulate in f32.
    logits = lax.dot_general(
        emb_ref[...], w_ref[...],
        dimension_numbers=(((1,), (1,)), ((), ())),
        preferred_element_type=jnp.float32)                   # (TB, TC) f32
    logits = jnp.clip(logits, -1.0 + 1e-07, 1.0 - 1e-07)

    tb, tc = logits.shape
    labels = labels_ref[...]                                  # (TB, 1) int32
    col = lax.broadcasted_iota(jnp.int32, (tb, tc), 1) + ci * class_tile
    tgt = col == labels                                       # reused twice below

    # Fused adaptive margin + feature scale:
    #   s * (logit - (m + h*(1 - logit))) == (s*(1+h))*logit - s*(m+h)
    zt = (s * (1.0 + h)) * logits - (s * (m + h))             # target branch
    z = jnp.where(tgt, zt, s * logits)

    # ---- online log-sum-exp update -------------------------------------------
    m_prev = m_scr[...]
    m_new = jnp.maximum(m_prev, jnp.max(z, axis=1, keepdims=True))
    alpha = jnp.exp(m_prev - m_new)
    # TODO(synk): on v6e/v7x the exp below could run in bf16 (f32 row-sum) for
    # ~2x EUP throughput; kept f32 to preserve verification tolerances everywhere.
    l_scr[...] = alpha * l_scr[...] + jnp.sum(jnp.exp(z - m_new), axis=1,
                                              keepdims=True)
    t_scr[...] = t_scr[...] + jnp.sum(jnp.where(tgt, zt, 0.0), axis=1,
                                      keepdims=True)
    m_scr[...] = m_new

    # ---- finalize per-example loss on the last class tile --------------------
    @pl.when(ci == pl.num_programs(1) - 1)
    def _final():
        l = l_scr[...]
        if num_padded:
            # Zero-padded weight rows give exactly z == 0, so each padded class
            # contributes exactly exp(0 - m_final) to the running sum.  Remove
            # that mass here once instead of masking every (TB, TC) step.
            l = l - num_padded * jnp.exp(-m_scr[...])
        out_ref[...] = (m_scr[...] + jnp.log(l)) - t_scr[...]


def adaface_loss(embeddings, weight, labels, m=0.4, h=0.333, s=64.0,
                 mxu_dtype=jnp.bfloat16, batch_tile=None, class_tile=None,
                 vmem_limit_bytes=None):
    """AdaFace forward loss.  embeddings (B,E), weight (C,E), labels (B,) -> f32.

    NOTE: mxu_dtype=jnp.float32 is a VERIFICATION-ONLY path — the v5e MXU is
    bf16/int only (f32 matmul lowers to slow multi-pass emulation) and it is
    slower on v6e/v7x too.  Production should keep the default bf16.
    """
    B, E = embeddings.shape
    C, E2 = weight.shape
    assert E == E2
    eps = 1e-12

    chip = _tpu_generation()

    # ---- chip-aware tile / VMEM defaults -------------------------------------
    if batch_tile is None:
        # v6e's MXU/HBM balance point (~650 flop/byte) wants the larger batch
        # tile; v5e (~240) and v7x (~310) are near balance at 256 with bf16
        # weights.
        batch_tile = 512 if chip == "v6e" else 256
    if class_tile is None:
        # 128 MiB-VMEM chips can afford a deeper streamed class tile to
        # amortize the ~0.35 us per-grid-step overhead.
        class_tile = 4096 if chip in ("v5e", "v6e") else 2048
    if vmem_limit_bytes is None:
        if chip in ("v5e", "v6e"):
            vmem_limit_bytes = 100 * 1024 * 1024
        elif chip == "v7x":
            vmem_limit_bytes = 52 * 1024 * 1024   # 64 MiB/TC total on v7x
        else:
            vmem_limit_bytes = 48 * 1024 * 1024

    TB = min(batch_tile, _round_up(B, 8))
    if chip == "v7x" and _round_up(B, 8) > 8:
        # Megacore: guarantee >=2 batch tiles so both TensorCores get work.
        TB = min(TB, _round_up((B + 1) // 2, 8))
    TC = min(class_tile, _round_up(C, 128))
    B_pad = _round_up(B, TB)
    C_pad = _round_up(C, TC)

    # ---- hoisted normalization (done once, not once per class tile) ----------
    # max(||x||, eps) == sqrt(max(||x||^2, eps^2)), so rsqrt on the clamped sum
    # of squares matches F.normalize semantics.  Zero rows stay exactly zero.
    emb = embeddings.astype(jnp.float32)
    emb_n = emb * lax.rsqrt(
        jnp.maximum(jnp.sum(emb * emb, axis=1, keepdims=True), eps * eps))
    w = weight.astype(jnp.float32)
    w_n = w * lax.rsqrt(
        jnp.maximum(jnp.sum(w * w, axis=1, keepdims=True), eps * eps))

    emb_n = emb_n.astype(mxu_dtype)
    w_n = w_n.astype(mxu_dtype)
    lab = labels.astype(jnp.int32).reshape(B, 1)

    if B_pad != B:
        emb_n = jnp.pad(emb_n, ((0, B_pad - B), (0, 0)))
        lab = jnp.pad(lab, ((0, B_pad - B), (0, 0)))
    if C_pad != C:
        # Padded rows are exact zeros -> padded cosines are exactly 0; their
        # LSE mass is removed exactly in the kernel's finalize step.
        w_n = jnp.pad(w_n, ((0, C_pad - C), (0, 0)))

    grid = (B_pad // TB, C_pad // TC)

    kernel = functools.partial(
        adaface_loss_kernel,
        m=float(m), h=float(h), s=float(s),
        class_tile=TC, num_padded=C_pad - C)

    per_example = pl.pallas_call(
        kernel,
        out_shape=jax.ShapeDtypeStruct((B_pad, 1), jnp.float32),
        grid_spec=pltpu.PrefetchScalarGridSpec(
            num_scalar_prefetch=0,
            grid=grid,
            in_specs=[
                pl.BlockSpec((TB, E), lambda bi, ci: (bi, 0)),   # embeddings (resident across ci)
                pl.BlockSpec((TC, E), lambda bi, ci: (ci, 0)),   # bf16 weight stream
                pl.BlockSpec((TB, 1), lambda bi, ci: (bi, 0)),   # labels
            ],
            out_specs=pl.BlockSpec((TB, 1), lambda bi, ci: (bi, 0)),
            scratch_shapes=[
                pltpu.VMEM((TB, 1), jnp.float32),   # running max
                pltpu.VMEM((TB, 1), jnp.float32),   # running sum-exp
                pltpu.VMEM((TB, 1), jnp.float32),   # running target logit
            ],
        ),
        compiler_params=pltpu.CompilerParams(
            dimension_semantics=("parallel", "arbitrary"),
            vmem_limit_bytes=vmem_limit_bytes,
        ),
    )(emb_n, w_n, lab)

    # Padded batch rows are sliced off here (do not move this sum into the kernel).
    return jnp.sum(per_example[:B, 0]) / B


def reference_adaface_loss(embeddings, weight, labels, m=0.4, h=0.333, s=64.0):
    """Pure-JAX reference mirroring the PyTorch forward (f32 throughout)."""
    eps = 1e-12
    e = embeddings / jnp.maximum(
        jnp.linalg.norm(embeddings, axis=1, keepdims=True), eps)
    w = weight / jnp.maximum(jnp.linalg.norm(weight, axis=1, keepdims=True), eps)
    logits = jnp.clip(e @ w.T, -1.0 + 1e-07, 1.0 - 1e-07)
    margin = m + h * (1.0 - logits)
    onehot = jax.nn.one_hot(labels, logits.shape[1], dtype=logits.dtype)
    logits = jnp.where(onehot > 0, logits - margin, logits) * s
    logp = jax.nn.log_softmax(logits, axis=1)
    return -jnp.mean(jnp.sum(onehot * logp, axis=1))


if __name__ == "__main__":
    key = jax.random.PRNGKey(0)
    k_emb, k_w, k_lab = jax.random.split(key, 3)

    batch = 8
    embedding_size = 32
    class_num = 16

    embeddings = jax.random.normal(k_emb, (batch, embedding_size), jnp.float32)

    # Deterministic Xavier-uniform init for weight (class_num, embedding_size).
    bound = math.sqrt(6.0 / (embedding_size + class_num))
    weight = jax.random.uniform(
        k_w, (class_num, embedding_size), jnp.float32, minval=-bound, maxval=bound)

    labels = jax.random.randint(k_lab, (batch,), 0, class_num, jnp.int32)

    ref = reference_adaface_loss(embeddings, weight, labels)

    # Tight check with the f32 MXU path (verification only; slow on real sizes).
    loss_f32 = adaface_loss(embeddings, weight, labels, mxu_dtype=jnp.float32)
    loss_f32 = jax.block_until_ready(loss_f32)
    assert jnp.allclose(loss_f32, ref, atol=5e-4, rtol=5e-4), (loss_f32, ref)

    # Default (bf16 MXU) fast path; bf16 cosine error * s=64 => looser tolerance.
    loss_bf16 = adaface_loss(embeddings, weight, labels)
    loss_bf16 = jax.block_until_ready(loss_bf16)
    assert jnp.allclose(loss_bf16, ref, atol=3e-2, rtol=3e-2), (loss_bf16, ref)

    print("KERNEL_OK")
</pallas_src>

<mosaic_0001>
module attributes {stable_mosaic.version = 11 : i64} {
  func.func @adaface_loss_kernel(%arg0: i32, %arg1: i32, %arg2: memref<8x32xf32, #tpu.memory_space<vmem>>, %arg3: memref<128x32xf32, #tpu.memory_space<vmem>>, %arg4: memref<8x1xi32, #tpu.memory_space<vmem>>, %arg5: memref<8x1xf32, #tpu.memory_space<vmem>>, %arg6: memref<8x1xf32, #tpu.memory_space<vmem>>, %arg7: memref<8x1xf32, #tpu.memory_space<vmem>>, %arg8: memref<8x1xf32, #tpu.memory_space<vmem>>) attributes {dimension_semantics = [#tpu.dimension_semantics<parallel>, #tpu.dimension_semantics<arbitrary>], iteration_bounds = array<i64: 1, 1>, scalar_prefetch = 0 : i64, scratch_operands = 3 : i64, tpu.core_type = #tpu.core_type<tc>, window_params = [{transform_indices = @transform_0, window_bounds = array<i64: 8, 32>}, {transform_indices = @transform_1, window_bounds = array<i64: 128, 32>}, {transform_indices = @transform_2, window_bounds = array<i64: 8, 1>}, {transform_indices = @transform_3, window_bounds = array<i64: 8, 1>}]} {
    %c0_i32 = arith.constant 0 : i32
    %0 = arith.cmpi eq, %arg1, %c0_i32 : i32
    %1 = arith.extui %0 : i1 to i32
    %c0_i32_0 = arith.constant 0 : i32
    %2 = arith.cmpi ne, %1, %c0_i32_0 : i32
    scf.if %2 {
      %cst_29 = arith.constant -1.000000e+30 : f32
      %50 = vector.broadcast %cst_29 : f32 to vector<8x1xf32>
      %c0_30 = arith.constant 0 : index
      %c0_31 = arith.constant 0 : index
      %51 = vector.load %arg6[%c0_30, %c0_31] : memref<8x1xf32, #tpu.memory_space<vmem>>, vector<8x1xf32>
      tpu.vector_store %arg6[%c0_30, %c0_31], %50 {strides = array<i32>} : memref<8x1xf32, #tpu.memory_space<vmem>>, vector<8x1xf32>,
      %cst_32 = arith.constant 0.000000e+00 : f32
      %52 = vector.broadcast %cst_32 : f32 to vector<8x1xf32>
      %c0_33 = arith.constant 0 : index
      %c0_34 = arith.constant 0 : index
      %53 = vector.load %arg7[%c0_33, %c0_34] : memref<8x1xf32, #tpu.memory_space<vmem>>, vector<8x1xf32>
      tpu.vector_store %arg7[%c0_33, %c0_34], %52 {strides = array<i32>} : memref<8x1xf32, #tpu.memory_space<vmem>>, vector<8x1xf32>,
      %cst_35 = arith.constant 0.000000e+00 : f32
      %54 = vector.broadcast %cst_35 : f32 to vector<8x1xf32>
      %c0_36 = arith.constant 0 : index
      %c0_37 = arith.constant 0 : index
      %55 = vector.load %arg8[%c0_36, %c0_37] : memref<8x1xf32, #tpu.memory_space<vmem>>, vector<8x1xf32>
      tpu.vector_store %arg8[%c0_36, %c0_37], %54 {strides = array<i32>} : memref<8x1xf32, #tpu.memory_space<vmem>>, vector<8x1xf32>,
    } else {
    }
    %c0 = arith.constant 0 : index
    %c0_1 = arith.constant 0 : index
    %3 = vector.load %arg2[%c0, %c0_1] : memref<8x32xf32, #tpu.memory_space<vmem>>, vector<8x32xf32>
    %c0_2 = arith.constant 0 : index
    %c0_3 = arith.constant 0 : index
    %4 = vector.load %arg3[%c0_2, %c0_3] : memref<128x32xf32, #tpu.memory_space<vmem>>, vector<128x32xf32>
    %cst = arith.constant dense<0.000000e+00> : vector<8x128xf32>
    %5 = tpu.matmul %3, %4, %cst {dimension_numbers = #tpu.dot_dimension_numbers<[1], [1], [0], [0], [0, 0, 1, 0], [], []>} : vector<8x32xf32>, vector<128x32xf32>, vector<8x128xf32> -> vector<8x128xf32>
    %cst_4 = arith.constant -0.99999988 : f32
    %cst_5 = arith.constant 0.99999988 : f32
    %6 = vector.broadcast %cst_4 : f32 to vector<8x128xf32>
    %7 = arith.maximumf %6, %5 : vector<8x128xf32>
    %8 = vector.broadcast %cst_5 : f32 to vector<8x128xf32>
    %9 = arith.minimumf %8, %7 : vector<8x128xf32>
    %c0_6 = arith.constant 0 : index
    %c0_7 = arith.constant 0 : index
    %10 = vector.load %arg4[%c0_6, %c0_7] : memref<8x1xi32, #tpu.memory_space<vmem>>, vector<8x1xi32>
    %11 = tpu.iota {dimensions = array<i32: 1>} : vector<8x128xi32>
    %c128_i32 = arith.constant 128 : i32
    %12 = arith.muli %arg1, %c128_i32 : i32
    %13 = vector.broadcast %12 : i32 to vector<8x128xi32>
    %14 = arith.addi %11, %13 : vector<8x128xi32>
    %15 = vector.broadcast %10 : vector<8x1xi32> to vector<8x128xi32>
    %16 = arith.cmpi eq, %14, %15 : vector<8x128xi32>
    %cst_8 = arith.constant 85.3119964 : f32
    %17 = vector.broadcast %cst_8 : f32 to vector<8x128xf32>
    %18 = arith.mulf %17, %9 : vector<8x128xf32>
    %cst_9 = arith.constant 4.691200e+01 : f32
    %19 = vector.broadcast %cst_9 : f32 to vector<8x128xf32>
    %20 = arith.subf %18, %19 : vector<8x128xf32>
    %cst_10 = arith.constant 6.400000e+01 : f32
    %21 = vector.broadcast %cst_10 : f32 to vector<8x128xf32>
    %22 = arith.mulf %21, %9 : vector<8x128xf32>
    %23 = arith.select %16, %20, %22 : vector<8x128xi1>, vector<8x128xf32>
    %c0_11 = arith.constant 0 : index
    %c0_12 = arith.constant 0 : index
    %24 = vector.load %arg6[%c0_11, %c0_12] : memref<8x1xf32, #tpu.memory_space<vmem>>, vector<8x1xf32>
    %cst_13 = arith.constant dense<0xFF800000> : vector<8xf32>
    %25 = vector.multi_reduction <maximumf>, %23, %cst_13 [1] : vector<8x128xf32> to vector<8xf32>
    %26 = vector.shape_cast %25 : vector<8xf32> to vector<8x1xf32>
    %27 = arith.maximumf %24, %26 : vector<8x1xf32>
    %28 = arith.subf %24, %27 : vector<8x1xf32>
    %29 = math.exp %28 : vector<8x1xf32>
    %c0_14 = arith.constant 0 : index
    %c0_15 = arith.constant 0 : index
    %30 = vector.load %arg7[%c0_14, %c0_15] : memref<8x1xf32, #tpu.memory_space<vmem>>, vector<8x1xf32>
    %31 = arith.mulf %29, %30 : vector<8x1xf32>
    %32 = vector.broadcast %27 : vector<8x1xf32> to vector<8x128xf32>
    %33 = arith.subf %23, %32 : vector<8x128xf32>
    %34 = math.exp %33 : vector<8x128xf32>
    %cst_16 = arith.constant dense<0.000000e+00> : vector<8xf32>
    %35 = vector.multi_reduction <add>, %34, %cst_16 [1] : vector<8x128xf32> to vector<8xf32>
    %36 = vector.shape_cast %35 : vector<8xf32> to vector<8x1xf32>
    %37 = arith.addf %31, %36 : vector<8x1xf32>
    %c0_17 = arith.constant 0 : index
    %c0_18 = arith.constant 0 : index
    %38 = vector.load %arg7[%c0_17, %c0_18] : memref<8x1xf32, #tpu.memory_space<vmem>>, vector<8x1xf32>
    tpu.vector_store %arg7[%c0_17, %c0_18], %37 {strides = array<i32>} : memref<8x1xf32, #tpu.memory_space<vmem>>, vector<8x1xf32>,
    %c0_19 = arith.constant 0 : index
    %c0_20 = arith.constant 0 : index
    %39 = vector.load %arg8[%c0_19, %c0_20] : memref<8x1xf32, #tpu.memory_space<vmem>>, vector<8x1xf32>
    %cst_21 = arith.constant 0.000000e+00 : f32
    %40 = vector.broadcast %cst_21 : f32 to vector<8x128xf32>
    %41 = arith.select %16, %20, %40 : vector<8x128xi1>, vector<8x128xf32>
    %cst_22 = arith.constant dense<0.000000e+00> : vector<8xf32>
    %42 = vector.multi_reduction <add>, %41, %cst_22 [1] : vector<8x128xf32> to vector<8xf32>
    %43 = vector.shape_cast %42 : vector<8xf32> to vector<8x1xf32>
    %44 = arith.addf %39, %43 : vector<8x1xf32>
    %c0_23 = arith.constant 0 : index
    %c0_24 = arith.constant 0 : index
    %45 = vector.load %arg8[%c0_23, %c0_24] : memref<8x1xf32, #tpu.memory_space<vmem>>, vector<8x1xf32>
    tpu.vector_store %arg8[%c0_23, %c0_24], %44 {strides = array<i32>} : memref<8x1xf32, #tpu.memory_space<vmem>>, vector<8x1xf32>,
    %c0_25 = arith.constant 0 : index
    %c0_26 = arith.constant 0 : index
    %46 = vector.load %arg6[%c0_25, %c0_26] : memref<8x1xf32, #tpu.memory_space<vmem>>, vector<8x1xf32>
    tpu.vector_store %arg6[%c0_25, %c0_26], %27 {strides = array<i32>} : memref<8x1xf32, #tpu.memory_space<vmem>>, vector<8x1xf32>,
    %c0_i32_27 = arith.constant 0 : i32
    %47 = arith.cmpi eq, %arg1, %c0_i32_27 : i32
    %48 = arith.extui %47 : i1 to i32
    %c0_i32_28 = arith.constant 0 : i32
    %49 = arith.cmpi ne, %48, %c0_i32_28 : i32
    scf.if %49 {
      %c0_29 = arith.constant 0 : index
      %c0_30 = arith.constant 0 : index
      %50 = vector.load %arg7[%c0_29, %c0_30] : memref<8x1xf32, #tpu.memory_space<vmem>>, vector<8x1xf32>
      %c0_31 = arith.constant 0 : index
      %c0_32 = arith.constant 0 : index
      %51 = vector.load %arg6[%c0_31, %c0_32] : memref<8x1xf32, #tpu.memory_space<vmem>>, vector<8x1xf32>
      %cst_33 = arith.constant 0.000000e+00 : f32
      %52 = vector.broadcast %cst_33 : f32 to vector<8x1xf32>
      %53 = arith.subf %52, %51 : vector<8x1xf32>
      %54 = math.exp %53 : vector<8x1xf32>
      %cst_34 = arith.constant 1.120000e+02 : f32
      %55 = vector.broadcast %cst_34 : f32 to vector<8x1xf32>
      %56 = arith.mulf %55, %54 : vector<8x1xf32>
      %57 = arith.subf %50, %56 : vector<8x1xf32>
      %c0_35 = arith.constant 0 : index
      %c0_36 = arith.constant 0 : index
      %58 = vector.load %arg6[%c0_35, %c0_36] : memref<8x1xf32, #tpu.memory_space<vmem>>, vector<8x1xf32>
      %59 = math.log %57 : vector<8x1xf32>
      %60 = arith.addf %58, %59 : vector<8x1xf32>
      %c0_37 = arith.constant 0 : index
      %c0_38 = arith.constant 0 : index
      %61 = vector.load %arg8[%c0_37, %c0_38] : memref<8x1xf32, #tpu.memory_space<vmem>>, vector<8x1xf32>
      %62 = arith.subf %60, %61 : vector<8x1xf32>
      %c0_39 = arith.constant 0 : index
      %c0_40 = arith.constant 0 : index
      %63 = vector.load %arg5[%c0_39, %c0_40] : memref<8x1xf32, #tpu.memory_space<vmem>>, vector<8x1xf32>
      tpu.vector_store %arg5[%c0_39, %c0_40], %62 {strides = array<i32>} : memref<8x1xf32, #tpu.memory_space<vmem>>, vector<8x1xf32>,
    } else {
    }
    return
  }
  func.func @transform_0(%arg0: i32, %arg1: i32) -> (i32, i32) {
    %c0_i32 = arith.constant 0 : i32
    %c0_i32_0 = arith.constant 0 : i32
    return %arg0, %c0_i32 : i32, i32
  }
  func.func @transform_1(%arg0: i32, %arg1: i32) -> (i32, i32) {
    %c0_i32 = arith.constant 0 : i32
    %c0_i32_0 = arith.constant 0 : i32
    return %arg1, %c0_i32 : i32, i32
  }
  func.func @transform_2(%arg0: i32, %arg1: i32) -> (i32, i32) {
    %c0_i32 = arith.constant 0 : i32
    %c0_i32_0 = arith.constant 0 : i32
    return %arg0, %c0_i32 : i32, i32
  }
  func.func @transform_3(%arg0: i32, %arg1: i32) -> (i32, i32) {
    %c0_i32 = arith.constant 0 : i32
    %c0_i32_0 = arith.constant 0 : i32
    return %arg0, %c0_i32 : i32, i32
  }
}

</mosaic_0001>

<llo_original>
// kernel: tpu_custom_call.1
$region0: #{tpu_custom_call.1}
  #allocation0 [shape = 'u32[]', space=smem, size = 0x4, offset = 0x4, fixed_abs, tag = 'smem constant byte address 0x4 - core index']
  #allocation1 [shape = 'u32[144,128]{1,0:T(1,128)}', space=vmem, size = 0x12000, scoped, tag = 'internal scratch']
  #allocation2 [shape = 'f32[8,1]{1,0:T(8,128)}', space=vmem, size = 0x1000, scoped, tag = 'scratch operand']
  #allocation3 [shape = 'f32[8,1]{1,0:T(8,128)}', space=vmem, size = 0x1000, scoped, tag = 'scratch operand']
  #allocation4 [shape = 'f32[8,1]{1,0:T(8,128)}', space=vmem, size = 0x1000, scoped, tag = 'scratch operand']
  %s0 = inlined_call_operand.vmem [shape: f32[8,32], index: 0, kind: input, shape index: {}]
  %s1 = inlined_call_operand.vmem [shape: f32[128,32], index: 1, kind: input, shape index: {}]
  %s2 = inlined_call_operand.vmem [shape: s32[8,1], index: 2, kind: input, shape index: {}]
  %s3 = inlined_call_operand.vmem [shape: f32[8,1], index: 3, kind: output, shape index: {}]
  %s4 = sld [smem:[#allocation0]]
  $region30: #{tpu_custom_call.1} parent=0
    _
  %s6 = ssub.s32 1, %s4
  %s7 = scalar_select 0, %s6, %s4
  // Predicated region
  $region2: #{tpu_custom_call.1} parent=0 // pred_check
    _
  $region3: #{tpu_custom_call.1} parent=0 // pred_check_branch
    %9 = sbr.rel (0) target = $region5
  $region4: #{tpu_custom_call.1} parent=0 // pred_region
    _
  $region5: #{tpu_custom_call.1} parent=0 // pred_fallthru
    _
  // Predicated region
  $region6: #{tpu_custom_call.1} parent=0 // pred_check
    _
  $region7: #{tpu_custom_call.1} parent=0 // pred_check_branch
    %11 = sbr.rel (0) target = $region9
  $region8: #{tpu_custom_call.1} parent=0 // pred_region
    _
  $region9: #{tpu_custom_call.1} parent=0 // pred_fallthru
    _
  // Predicated region
  $region10: #{tpu_custom_call.1} parent=0 // pred_check
    _
  $region11: #{tpu_custom_call.1} parent=0 // pred_check_branch
    %13 = sbr.rel (0) target = $region13
  $region12: #{tpu_custom_call.1} parent=0 // pred_region
    _
  $region13: #{tpu_custom_call.1} parent=0 // pred_fallthru
    _
  %p14 = scmp.eq.s32.totalorder 0, 0
  // Predicated region
  $region14: #{tpu_custom_call.1} parent=0 // pred_check
    %p15 = pneg %p14
  $region15: #{tpu_custom_call.1} parent=0 // pred_check_branch
    %17 = sbr.rel (%p15) target = $region17
  $region16: #{tpu_custom_call.1} parent=0 // pred_region
    %vm18 = vcmask 7168
    %19 = vst.msk [vmem:[#allocation2] sm:$0xff] %vm18, -1e+30
    %20 = vst.msk [vmem:[#allocation3] sm:$0xff] %vm18, 0.0
    %21 = vst.msk [vmem:[#allocation4] sm:$0xff] %vm18, 0.0
  $region17: #{tpu_custom_call.1} parent=0 // pred_fallthru
    _
  %v22 = vld [vmem:[%s0] sm:$0xff]
  %v23 = vld [vmem:[%s1] sm:$0xff]
  %v24 = vld [vmem:[%s1 + $0x8] sm:$0xff]
  %v25 = vld [vmem:[%s1 + $0x10] sm:$0xff]
  %v26 = vld [vmem:[%s1 + $0x18] sm:$0xff]
  %v27 = vld [vmem:[%s1 + $0x20] sm:$0xff]
  %v28 = vld [vmem:[%s1 + $0x28] sm:$0xff]
  %v29 = vld [vmem:[%s1 + $0x30] sm:$0xff]
  %v30 = vld [vmem:[%s1 + $0x38] sm:$0xff]
  %v31 = vld [vmem:[%s1 + $0x40] sm:$0xff]
  %v32 = vld [vmem:[%s1 + $0x48] sm:$0xff]
  %v33 = vld [vmem:[%s1 + $0x50] sm:$0xff]
  %v34 = vld [vmem:[%s1 + $0x58] sm:$0xff]
  %v35 = vld [vmem:[%s1 + $0x60] sm:$0xff]
  %v36 = vld [vmem:[%s1 + $0x68] sm:$0xff]
  %v37 = vld [vmem:[%s1 + $0x70] sm:$0xff]
  %v38 = vld [vmem:[%s1 + $0x78] sm:$0xff]
  %vm39 = vcmask 261120
  %v41 = vsel %vm39, %v22, 0
  %v44 = vsel %vm39, %v23, 0
  %v47 = vsel %vm39, %v24, 0
  %v50 = vsel %vm39, %v25, 0
  %v53 = vsel %vm39, %v26, 0
  %v56 = vsel %vm39, %v27, 0
  %v59 = vsel %vm39, %v28, 0
  %v62 = vsel %vm39, %v29, 0
  %v65 = vsel %vm39, %v30, 0
  %v68 = vsel %vm39, %v31, 0
  %v71 = vsel %vm39, %v32, 0
  %v74 = vsel %vm39, %v33, 0
  %v77 = vsel %vm39, %v34, 0
  %v80 = vsel %vm39, %v35, 0
  %v83 = vsel %vm39, %v36, 0
  %v86 = vsel %vm39, %v37, 0
  %v89 = vsel %vm39, %v38, 0
  %91 = vmatprep.subr.mxu0 0.0
  %92 = vmatpush1.xpose.msra.mxu0 %v44
  %93 = vmatprep.subr.mxu0 0.0
  %94 = vmatpush1.xpose.msra.mxu0 %v47
  %95 = vmatprep.subr.mxu0 0.0
  %96 = vmatpush1.xpose.msra.mxu0 %v50
  %97 = vmatprep.subr.mxu0 0.0
  %98 = vmatpush1.xpose.msra.mxu0 %v53
  %99 = vmatprep.subr.mxu0 0.0
  %100 = vmatpush1.xpose.msra.mxu0 %v56
  %101 = vmatprep.subr.mxu0 0.0
  %102 = vmatpush1.xpose.msra.mxu0 %v59
  %103 = vmatprep.subr.mxu0 0.0
  %104 = vmatpush1.xpose.msra.mxu0 %v62
  %105 = vmatprep.subr.mxu0 0.0
  %106 = vmatpush1.xpose.msra.mxu0 %v65
  %107 = vmatprep.subr.mxu0 0.0
  %108 = vmatpush1.xpose.msra.mxu0 %v68
  %109 = vmatprep.subr.mxu0 0.0
  %110 = vmatpush1.xpose.msra.mxu0 %v71
  %111 = vmatprep.subr.mxu0 0.0
  %112 = vmatpush1.xpose.msra.mxu0 %v74
  %113 = vmatprep.subr.mxu0 0.0
  %114 = vmatpush1.xpose.msra.mxu0 %v77
  %115 = vmatprep.subr.mxu0 0.0
  %116 = vmatpush1.xpose.msra.mxu0 %v80
  %117 = vmatprep.subr.mxu0 0.0
  %118 = vmatpush1.xpose.msra.mxu0 %v83
  %119 = vmatprep.subr.mxu0 0.0
  %120 = vmatpush1.xpose.msra.mxu0 %v86
  %121 = vmatprep.subr.mxu0 0.0
  %122 = vmatpush1.xpose.msra.mxu0 %v89
  %123 = vmatprep.subr.mxu0 0.0
  %124 = vmatpush1.xpose.msra.mxu0 0.0
  %125 = vmatprep.subr.mxu0 0.0
  %126 = vmatpush1.xpose.msra.mxu0 0.0
  %127 = vmatprep.subr.mxu0 0.0
  %128 = vmatpush1.xpose.msra.mxu0 0.0
  %129 = vmatprep.subr.mxu0 0.0
  %130 = vmatpush1.xpose.msra.mxu0 0.0
  %131 = vmatprep.subr.mxu0 0.0
  %132 = vmatpush1.xpose.msra.mxu0 0.0
  %133 = vmatprep.subr.mxu0 0.0
  %134 = vmatpush1.xpose.msra.mxu0 0.0
  %135 = vmatprep.subr.mxu0 0.0
  %136 = vmatpush1.xpose.msra.mxu0 0.0
  %137 = vmatprep.subr.mxu0 0.0
  %138 = vmatpush1.xpose.msra.mxu0 0.0
  %139 = vmatprep.subr.mxu0 0.0
  %140 = vmatpush1.xpose.msra.mxu0 0.0
  %141 = vmatprep.subr.mxu0 0.0
  %142 = vmatpush1.xpose.msra.mxu0 0.0
  %143 = vmatprep.subr.mxu0 0.0
  %144 = vmatpush1.xpose.msra.mxu0 0.0
  %145 = vmatprep.subr.mxu0 0.0
  %146 = vmatpush1.xpose.msra.mxu0 0.0
  %147 = vmatprep.subr.mxu0 0.0
  %148 = vmatpush1.xpose.msra.mxu0 0.0
  %149 = vmatprep.subr.mxu0 0.0
  %150 = vmatpush1.xpose.msra.mxu0 0.0
  %151 = vmatprep.subr.mxu0 0.0
  %152 = vmatpush1.xpose.msra.mxu0 0.0
  %153 = vmatprep.subr.mxu0 0.0
  %154 = vmatpush1.xpose.msra.mxu0 0.0
  %155 = vmatprep.mubr.f32.mxu0 0.0
  %156 = vmatmul.mubr.f32.gmra.mrb[0].mxu0 %v41
  %v157 = vpop.f32.mrb[0].mxu0
  %v158 = vadd.f32 0.0, %v157
  %v159 = vpop.f32.mrb[0].mxu0
  %160 = vdwg.mxu0
  %v161 = vmax.f32 %v158, -0.9999999
  %v162 = vmin.f32 %v161, 0.9999999
  %v163 = vld [vmem:[%s2] sm:$0xff]
  %v164 = vlaneseq
  %v165 = vand.u32 %v164, 127
  %s166 = smul.u32 0, 128
  %v167 = vstv %s166
  %v168 = vadd.s32 %v165, %v167
  %169 = vset.pattern.permute.xlu0 0
  %170 = vperm.xlu0 %169, %v163
  %v171 = vpop.permute.xlu0 %170
  %vm172 = vcmp.eq.s32.totalorder %v168, %v171
  %v173 = vmul.f32 %v162, 85.312
  %v174 = vsub.f32 %v173, 46.912
  %v175 = vmul.f32 %v162, 64.0
  %v176 = vsel %vm172, %v174, %v175
  %v177 = vld [vmem:[#allocation2] sm:$0xff]
  %178 = vmax.xlane.f32.xlu0 %v176
  %v179 = vpop.xlane.xlu0 %178
  %v180 = vmax.f32 %v177, %v179
  %v181 = vsub.f32 %v177, %v180
  %v182 = vmul.f32 %v181, 1.442695
  %v183 = vpow.pop %v182
  %v184 = vld [vmem:[#allocation3] sm:$0xff]
  %v185 = vmul.f32 %v183, %v184
  %187 = vset.pattern.permute.xlu0 0
  %188 = vperm.xlu0 %187, %v180
  %v189 = vpop.permute.xlu0 %188
  %v191 = vsub.f32 %v176, %v189
  %v192 = vmul.f32 %v191, 1.442695
  %v193 = vpow.pop %v192
  %194 = vadd.xlane.f32.xlu0 %v193
  %v195 = vpop.xlane.xlu0 %194
  %v196 = vadd.f32 %v185, %v195
  %vm197 = vcmask 7168
  %198 = vst.msk [vmem:[#allocation3] sm:$0xff] %vm197, %v196
  %v199 = vld [vmem:[#allocation4] sm:$0xff]
  %v200 = vsel %vm172, %v174, 0.0
  %201 = vadd.xlane.f32.xlu0 %v200
  %v202 = vpop.xlane.xlu0 %201
  %v203 = vadd.f32 %v199, %v202
  %204 = vst.msk [vmem:[#allocation4] sm:$0xff] %vm197, %v203
  %205 = vst.msk [vmem:[#allocation2] sm:$0xff] %vm197, %v180
  // Predicated region
  $region18: #{tpu_custom_call.1} parent=0 // pred_check
    %p206 = pneg %p14
  $region19: #{tpu_custom_call.1} parent=0 // pred_check_branch
    %208 = sbr.rel (%p206) target = $region21
  $region20: #{tpu_custom_call.1} parent=0 // pred_region
    %v209 = vld [vmem:[#allocation3] sm:$0xff]
    %v210 = vld [vmem:[#allocation2] sm:$0xff]
    %v211 = vsub.f32 0.0, %v210
    %v212 = vmul.f32 %v211, 1.442695
    %v213 = vpow.pop %v212
    %v214 = vmul.f32 %v213, 112.0
    %v215 = vsub.f32 %v209, %v214
    %v216 = vlog2.pop %v215
    %v217 = vmul.f32 %v216, 0.6931472
    %v218 = vadd.f32 %v210, %v217
    %v219 = vld [vmem:[#allocation4] sm:$0xff]
    %v220 = vsub.f32 %v218, %v219
    %221 = vst.msk [vmem:[%s3] sm:$0xff] %vm197, %v220
  $region21: #{tpu_custom_call.1} parent=0 // pred_fallthru
    _
  // Predicated region
  $region22: #{tpu_custom_call.1} parent=0 // pred_check
    _
  $region23: #{tpu_custom_call.1} parent=0 // pred_check_branch
    %223 = sbr.rel (0) target = $region25
  $region24: #{tpu_custom_call.1} parent=0 // pred_region
    _
  $region25: #{tpu_custom_call.1} parent=0 // pred_fallthru
    _
  // Predicated region
  $region26: #{tpu_custom_call.1} parent=0 // pred_check
    _
  $region27: #{tpu_custom_call.1} parent=0 // pred_check_branch
    %225 = sbr.rel (0) target = $region29
  $region28: #{tpu_custom_call.1} parent=0 // pred_region
    _
  $region29: #{tpu_custom_call.1} parent=0 // pred_fallthru
    _

</llo_original>
